<compile_context>
chip_gen: v5e
topology: v5e:2x2
jax: 0.10.0
libtpu: 0.0.40
codegen_flags: <defaults>
</compile_context>

<pallas_src>
import jax
import jax.numpy as jnp
import numpy as np
from jax import lax
from jax.experimental import pallas as pl
from jax.experimental.pallas import tpu as pltpu

LANES = 128
MAX_TILE_ROWS = 2048      # 2048 x 128 f32 = 1 MiB per input per pipeline buffer


def _cdiv(a, b):
    return -(-a // b)


def _round_up(a, m):
    return _cdiv(a, m) * m


def _num_tensorcores():
    """Best-effort TensorCore count of the default device (2 on v4/v5p/v7x)."""
    try:
        kind = jax.devices()[0].device_kind.lower()
    except Exception:
        return 1
    if any(tag in kind for tag in ("v4", "v5p", "v7", "tpu7")):
        return 2
    return 1


def _make_pass1_kernel(steps, tile_rows, n_true, needs_mask):
    """Per-lane max(pred-target), sum of masked |diff|, and #valid."""
    groups = tile_rows // 8
    tshape = (tile_rows, LANES)

    def kernel(p_ref, t_ref, o_ref, max_acc, abs_acc, nv_acc):
        c = pl.program_id(0)
        i = pl.program_id(1)

        @pl.when(i == 0)
        def _():
            max_acc[...] = jnp.full_like(max_acc, -jnp.inf)
            abs_acc[...] = jnp.zeros_like(abs_acc)
            nv_acc[...] = jnp.zeros_like(nv_acc)

        p = p_ref[...].astype(jnp.float32)
        t = t_ref[...].astype(jnp.float32)
        d = p - t
        if needs_mask:
            base = (c * steps + i) * (tile_rows * LANES)
            idx = (base
                   + lax.broadcasted_iota(jnp.int32, tshape, 0) * LANES
                   + lax.broadcasted_iota(jnp.int32, tshape, 1))
            in_b = idx < n_true
            d_max = jnp.where(in_b, d, -jnp.inf)
            valid = in_b & (t > 0.0)
        else:
            d_max = d
            valid = t > 0.0
        adiff = jnp.where(valid, jnp.abs(d), 0.0)

        def r3(x):
            return x.reshape(groups, 8, LANES)

        max_acc[...] = jnp.maximum(max_acc[...], jnp.max(r3(d_max), axis=0))
        abs_acc[...] += jnp.sum(r3(adiff), axis=0)
        nv_acc[...] += jnp.sum(r3(valid.astype(jnp.float32)), axis=0)

        @pl.when(i == pl.num_programs(1) - 1)
        def _():
            o_ref[0:8, :] = max_acc[...]
            o_ref[8:16, :] = abs_acc[...]
            o_ref[16:24, :] = nv_acc[...]

    return kernel


def _make_pass2_kernel(steps, tile_rows, n_true, needs_mask):
    """Per-lane sum of diff^2 over the huber set, and #huber."""
    groups = tile_rows // 8
    tshape = (tile_rows, LANES)

    def kernel(c_ref, p_ref, t_ref, o_ref, sq_acc, nh_acc):
        c = pl.program_id(0)
        i = pl.program_id(1)

        @pl.when(i == 0)
        def _():
            sq_acc[...] = jnp.zeros_like(sq_acc)
            nh_acc[...] = jnp.zeros_like(nh_acc)

        huber_c = c_ref[0, 0]
        p = p_ref[...].astype(jnp.float32)
        t = t_ref[...].astype(jnp.float32)
        if needs_mask:
            base = (c * steps + i) * (tile_rows * LANES)
            idx = (base
                   + lax.broadcasted_iota(jnp.int32, tshape, 0) * LANES
                   + lax.broadcasted_iota(jnp.int32, tshape, 1))
            valid = (idx < n_true) & (t > 0.0)
        else:
            valid = t > 0.0
        adiff = jnp.where(valid, jnp.abs(t - p), 0.0)
        hmask = valid & (adiff > huber_c)
        sq = jnp.where(hmask, adiff * adiff, 0.0)

        def r3(x):
            return x.reshape(groups, 8, LANES)

        sq_acc[...] += jnp.sum(r3(sq), axis=0)
        nh_acc[...] += jnp.sum(r3(hmask.astype(jnp.float32)), axis=0)

        @pl.when(i == pl.num_programs(1) - 1)
        def _():
            o_ref[0:8, :] = sq_acc[...]
            o_ref[8:16, :] = nh_acc[...]

    return kernel


@jax.jit
def berhu_loss(pred, target):
    assert pred.ndim == target.ndim, "inconsistent dimensions"
    assert pred.shape == target.shape

    p = pred.reshape(-1)
    t = target.reshape(-1)
    if not jnp.issubdtype(p.dtype, jnp.floating):
        p = p.astype(jnp.float32)
    if not jnp.issubdtype(t.dtype, jnp.floating):
        t = t.astype(jnp.float32)
    n = p.shape[0]
    if n == 0:
        return jnp.array(jnp.nan, dtype=jnp.float32)

    # --- lane-dense (rows, 128) view; reshape is copy-free when n % 128 == 0 ---
    pad = (-n) % LANES
    if pad:
        # TODO(synk): a manual-DMA flat-array path would avoid this copy for the
        # (rare) case where the element count is not a multiple of 128.
        p = jnp.pad(p, (0, pad))
        t = jnp.pad(t, (0, pad))
    rows = (n + pad) // LANES
    p2 = p.reshape(rows, LANES)
    t2 = t.reshape(rows, LANES)

    # --- static tiling decisions (Python ints; shapes are static under jit) ---
    splits = _num_tensorcores() if rows >= 32 else 1
    rows_per_split = _cdiv(rows, splits)
    # at least 2 pipeline steps per split for DMA/compute overlap
    tgt_steps = max(2, _cdiv(rows_per_split, MAX_TILE_ROWS))
    tile_rows = min(MAX_TILE_ROWS,
                    max(8, _round_up(_cdiv(rows_per_split, tgt_steps), 8)))
    steps = _cdiv(rows_per_split, tile_rows)
    # exact coverage -> no tail mask emitted at all (common image-shaped inputs)
    needs_mask = (splits * steps * tile_rows * LANES) != n
    last_block = _cdiv(rows, tile_rows) - 1   # clamp target for overhanging blocks

    grid = (splits, steps)
    cparams = pltpu.CompilerParams(dimension_semantics=("parallel", "arbitrary"))

    def in_spec():
        return pl.BlockSpec(
            (tile_rows, LANES),
            lambda c, i: (jnp.minimum(c * steps + i, last_block), 0))

    # ---- pass 1: per-lane max(pred-target), sum|diff| over valid, #valid ----
    out1 = pl.pallas_call(
        _make_pass1_kernel(steps, tile_rows, n, needs_mask),
        out_shape=jax.ShapeDtypeStruct((splits * 24, LANES), jnp.float32),
        grid_spec=pltpu.PrefetchScalarGridSpec(
            num_scalar_prefetch=0, grid=grid,
            in_specs=[in_spec(), in_spec()],
            out_specs=pl.BlockSpec((24, LANES), lambda c, i: (c, 0)),
            scratch_shapes=[pltpu.VMEM((8, LANES), jnp.float32)
                            for _ in range(3)]),
        compiler_params=cparams,
    )(p2, t2)

    s1 = out1.reshape(splits, 3, 8, LANES)
    huber_c = (0.2 * jnp.max(s1[:, 0])).reshape(1, 1).astype(jnp.float32)
    sum_abs = jnp.sum(s1[:, 1])
    n_valid = jnp.sum(s1[:, 2])

    # ---- pass 2: per-lane sum(diff^2) over huber set, #huber ----
    out2 = pl.pallas_call(
        _make_pass2_kernel(steps, tile_rows, n, needs_mask),
        out_shape=jax.ShapeDtypeStruct((splits * 16, LANES), jnp.float32),
        grid_spec=pltpu.PrefetchScalarGridSpec(
            num_scalar_prefetch=0, grid=grid,
            in_specs=[pl.BlockSpec(memory_space=pltpu.MemorySpace.SMEM),
                      in_spec(), in_spec()],
            out_specs=pl.BlockSpec((16, LANES), lambda c, i: (c, 0)),
            scratch_shapes=[pltpu.VMEM((8, LANES), jnp.float32)
                            for _ in range(2)]),
        compiler_params=cparams,
    )(huber_c, p2, t2)

    s2 = out2.reshape(splits, 2, 8, LANES)
    sum_sq = jnp.sum(s2[:, 0])
    n_huber = jnp.sum(s2[:, 1])

    # mean(cat(diff, diff2)) == (sum|d| + sum d^2) / (n_valid + n_huber)
    # NOTE: 0/0 -> NaN when no element has target > 0, same as the PyTorch ref.
    return (sum_abs + sum_sq) / (n_valid + n_huber)


def _berhu_ref(pred, target):
    # pure-JAX reference matching the PyTorch semantics
    pred = pred.astype(jnp.float32)
    target = target.astype(jnp.float32)
    huber_c = 0.2 * jnp.max(pred - target)
    valid = target > 0
    diff = jnp.where(valid, jnp.abs(target - pred), 0.0)
    hmask = valid & (diff > huber_c)
    sum_abs = jnp.sum(diff)
    sum_sq = jnp.sum(jnp.where(hmask, diff * diff, 0.0))
    return (sum_abs + sum_sq) / (jnp.sum(valid) + jnp.sum(hmask))


if __name__ == "__main__":
    key = jax.random.PRNGKey(0)
    k1, k2, k3, k4, k5, k6 = jax.random.split(key, 6)

    # small NCHW depth-prediction style input (exactly lane-divisible path)
    pred = jax.random.normal(k1, (2, 4, 16, 16), jnp.float32)
    target = jax.random.normal(k2, (2, 4, 16, 16), jnp.float32)
    loss = jax.block_until_ready(berhu_loss(pred, target))
    ref = _berhu_ref(pred, target)
    assert np.isfinite(np.asarray(loss)), "loss is not finite"
    assert np.allclose(np.asarray(loss), np.asarray(ref), rtol=1e-5, atol=1e-6), (
        f"small mismatch: pallas={loss} ref={ref}")

    # ragged size exercising the in-kernel tail-mask path (1155 elements)
    pred_r = jax.random.normal(k3, (3, 5, 7, 11), jnp.float32)
    target_r = jax.random.normal(k4, (3, 5, 7, 11), jnp.float32)
    loss_r = jax.block_until_ready(berhu_loss(pred_r, target_r))
    ref_r = _berhu_ref(pred_r, target_r)
    assert np.isfinite(np.asarray(loss_r)), "ragged loss is not finite"
    assert np.allclose(np.asarray(loss_r), np.asarray(ref_r), rtol=1e-5, atol=1e-6), (
        f"ragged mismatch: pallas={loss_r} ref={ref_r}")

    # larger input exercising the multi-step pipelined (and multi-core) path
    pred_l = jax.random.normal(k5, (4, 2, 240, 320), jnp.float32)
    target_l = jax.random.normal(k6, (4, 2, 240, 320), jnp.float32)
    loss_l = jax.block_until_ready(berhu_loss(pred_l, target_l))
    ref_l = _berhu_ref(pred_l, target_l)
    assert np.isfinite(np.asarray(loss_l)), "large loss is not finite"
    assert np.allclose(np.asarray(loss_l), np.asarray(ref_l), rtol=1e-4, atol=1e-6), (
        f"large mismatch: pallas={loss_l} ref={ref_l}")

    print("KERNEL_OK")
</pallas_src>

<mosaic_0001>
module attributes {stable_mosaic.version = 11 : i64} {
  func.func @kernel(%arg0: i32, %arg1: i32, %arg2: memref<8x128xf32, #tpu.memory_space<vmem>>, %arg3: memref<8x128xf32, #tpu.memory_space<vmem>>, %arg4: memref<24x128xf32, #tpu.memory_space<vmem>>, %arg5: memref<8x128xf32, #tpu.memory_space<vmem>>, %arg6: memref<8x128xf32, #tpu.memory_space<vmem>>, %arg7: memref<8x128xf32, #tpu.memory_space<vmem>>) attributes {dimension_semantics = [#tpu.dimension_semantics<parallel>, #tpu.dimension_semantics<arbitrary>], iteration_bounds = array<i64: 1, 2>, scalar_prefetch = 0 : i64, scratch_operands = 3 : i64, tpu.core_type = #tpu.core_type<tc>, window_params = [{transform_indices = @transform_0, window_bounds = array<i64: 8, 128>}, {transform_indices = @transform_1, window_bounds = array<i64: 8, 128>}, {transform_indices = @transform_2, window_bounds = array<i64: 24, 128>}]} {
    %c0_i32 = arith.constant 0 : i32
    %0 = arith.cmpi eq, %arg1, %c0_i32 : i32
    %1 = arith.extui %0 : i1 to i32
    %c0_i32_0 = arith.constant 0 : i32
    %2 = arith.cmpi ne, %1, %c0_i32_0 : i32
    scf.if %2 {
      %cst_21 = arith.constant 0xFF800000 : f32
      %31 = vector.broadcast %cst_21 : f32 to vector<8x128xf32>
      %c0_22 = arith.constant 0 : index
      %c0_23 = arith.constant 0 : index
      %32 = vector.load %arg5[%c0_22, %c0_23] : memref<8x128xf32, #tpu.memory_space<vmem>>, vector<8x128xf32>
      tpu.vector_store %arg5[%c0_22, %c0_23], %31 {strides = array<i32>} : memref<8x128xf32, #tpu.memory_space<vmem>>, vector<8x128xf32>,
      %cst_24 = arith.constant 0.000000e+00 : f32
      %33 = vector.broadcast %cst_24 : f32 to vector<8x128xf32>
      %c0_25 = arith.constant 0 : index
      %c0_26 = arith.constant 0 : index
      %34 = vector.load %arg6[%c0_25, %c0_26] : memref<8x128xf32, #tpu.memory_space<vmem>>, vector<8x128xf32>
      tpu.vector_store %arg6[%c0_25, %c0_26], %33 {strides = array<i32>} : memref<8x128xf32, #tpu.memory_space<vmem>>, vector<8x128xf32>,
      %cst_27 = arith.constant 0.000000e+00 : f32
      %35 = vector.broadcast %cst_27 : f32 to vector<8x128xf32>
      %c0_28 = arith.constant 0 : index
      %c0_29 = arith.constant 0 : index
      %36 = vector.load %arg7[%c0_28, %c0_29] : memref<8x128xf32, #tpu.memory_space<vmem>>, vector<8x128xf32>
      tpu.vector_store %arg7[%c0_28, %c0_29], %35 {strides = array<i32>} : memref<8x128xf32, #tpu.memory_space<vmem>>, vector<8x128xf32>,
    } else {
    }
    %c0 = arith.constant 0 : index
    %c0_1 = arith.constant 0 : index
    %3 = vector.load %arg2[%c0, %c0_1] : memref<8x128xf32, #tpu.memory_space<vmem>>, vector<8x128xf32>
    %c0_2 = arith.constant 0 : index
    %c0_3 = arith.constant 0 : index
    %4 = vector.load %arg3[%c0_2, %c0_3] : memref<8x128xf32, #tpu.memory_space<vmem>>, vector<8x128xf32>
    %5 = arith.subf %3, %4 : vector<8x128xf32>
    %cst = arith.constant 0.000000e+00 : f32
    %6 = vector.broadcast %cst : f32 to vector<8x128xf32>
    %7 = arith.cmpf ogt, %4, %6 : vector<8x128xf32>
    %8 = math.absf %5 : vector<8x128xf32>
    %cst_4 = arith.constant 0.000000e+00 : f32
    %9 = vector.broadcast %cst_4 : f32 to vector<8x128xf32>
    %10 = arith.select %7, %8, %9 : vector<8x128xi1>, vector<8x128xf32>
    %c0_5 = arith.constant 0 : index
    %c0_6 = arith.constant 0 : index
    %11 = vector.load %arg5[%c0_5, %c0_6] : memref<8x128xf32, #tpu.memory_space<vmem>>, vector<8x128xf32>
    %12 = vector.shape_cast %5 : vector<8x128xf32> to vector<1x8x128xf32>
    %cst_7 = arith.constant dense<0xFF800000> : vector<8x128xf32>
    %13 = vector.multi_reduction <maximumf>, %12, %cst_7 [0] : vector<1x8x128xf32> to vector<8x128xf32>
    %14 = arith.maximumf %11, %13 : vector<8x128xf32>
    %c0_8 = arith.constant 0 : index
    %c0_9 = arith.constant 0 : index
    %15 = vector.load %arg5[%c0_8, %c0_9] : memref<8x128xf32, #tpu.memory_space<vmem>>, vector<8x128xf32>
    tpu.vector_store %arg5[%c0_8, %c0_9], %14 {strides = array<i32>} : memref<8x128xf32, #tpu.memory_space<vmem>>, vector<8x128xf32>,
    %c0_10 = arith.constant 0 : index
    %c0_11 = arith.constant 0 : index
    %16 = vector.load %arg6[%c0_10, %c0_11] : memref<8x128xf32, #tpu.memory_space<vmem>>, vector<8x128xf32>
    %17 = vector.shape_cast %10 : vector<8x128xf32> to vector<1x8x128xf32>
    %cst_12 = arith.constant dense<0.000000e+00> : vector<8x128xf32>
    %18 = vector.multi_reduction <add>, %17, %cst_12 [0] : vector<1x8x128xf32> to vector<8x128xf32>
    %19 = arith.addf %16, %18 : vector<8x128xf32>
    %c0_13 = arith.constant 0 : index
    %c0_14 = arith.constant 0 : index
    %20 = vector.load %arg6[%c0_13, %c0_14] : memref<8x128xf32, #tpu.memory_space<vmem>>, vector<8x128xf32>
    tpu.vector_store %arg6[%c0_13, %c0_14], %19 {strides = array<i32>} : memref<8x128xf32, #tpu.memory_space<vmem>>, vector<8x128xf32>,
    %c0_15 = arith.constant 0 : index
    %c0_16 = arith.constant 0 : index
    %21 = vector.load %arg7[%c0_15, %c0_16] : memref<8x128xf32, #tpu.memory_space<vmem>>, vector<8x128xf32>
    %22 = arith.extui %7 : vector<8x128xi1> to vector<8x128xi32>
    %23 = arith.sitofp %22 : vector<8x128xi32> to vector<8x128xf32>
    %24 = vector.shape_cast %23 : vector<8x128xf32> to vector<1x8x128xf32>
    %cst_17 = arith.constant dense<0.000000e+00> : vector<8x128xf32>
    %25 = vector.multi_reduction <add>, %24, %cst_17 [0] : vector<1x8x128xf32> to vector<8x128xf32>
    %26 = arith.addf %21, %25 : vector<8x128xf32>
    %c0_18 = arith.constant 0 : index
    %c0_19 = arith.constant 0 : index
    %27 = vector.load %arg7[%c0_18, %c0_19] : memref<8x128xf32, #tpu.memory_space<vmem>>, vector<8x128xf32>
    tpu.vector_store %arg7[%c0_18, %c0_19], %26 {strides = array<i32>} : memref<8x128xf32, #tpu.memory_space<vmem>>, vector<8x128xf32>,
    %c1_i32 = arith.constant 1 : i32
    %28 = arith.cmpi eq, %arg1, %c1_i32 : i32
    %29 = arith.extui %28 : i1 to i32
    %c0_i32_20 = arith.constant 0 : i32
    %30 = arith.cmpi ne, %29, %c0_i32_20 : i32
    scf.if %30 {
      %c0_21 = arith.constant 0 : index
      %c0_22 = arith.constant 0 : index
      %31 = vector.load %arg5[%c0_21, %c0_22] : memref<8x128xf32, #tpu.memory_space<vmem>>, vector<8x128xf32>
      %c0_23 = arith.constant 0 : index
      %c0_24 = arith.constant 0 : index
      %32 = vector.load %arg4[%c0_23, %c0_24] : memref<24x128xf32, #tpu.memory_space<vmem>>, vector<8x128xf32>
      tpu.vector_store %arg4[%c0_23, %c0_24], %31 {strides = array<i32>} : memref<24x128xf32, #tpu.memory_space<vmem>>, vector<8x128xf32>,
      %c0_25 = arith.constant 0 : index
      %c0_26 = arith.constant 0 : index
      %33 = vector.load %arg6[%c0_25, %c0_26] : memref<8x128xf32, #tpu.memory_space<vmem>>, vector<8x128xf32>
      %c8 = arith.constant 8 : index
      %c0_27 = arith.constant 0 : index
      %34 = vector.load %arg4[%c8, %c0_27] : memref<24x128xf32, #tpu.memory_space<vmem>>, vector<8x128xf32>
      tpu.vector_store %arg4[%c8, %c0_27], %33 {strides = array<i32>} : memref<24x128xf32, #tpu.memory_space<vmem>>, vector<8x128xf32>,
      %c0_28 = arith.constant 0 : index
      %c0_29 = arith.constant 0 : index
      %35 = vector.load %arg7[%c0_28, %c0_29] : memref<8x128xf32, #tpu.memory_space<vmem>>, vector<8x128xf32>
      %c16 = arith.constant 16 : index
      %c0_30 = arith.constant 0 : index
      %36 = vector.load %arg4[%c16, %c0_30] : memref<24x128xf32, #tpu.memory_space<vmem>>, vector<8x128xf32>
      tpu.vector_store %arg4[%c16, %c0_30], %35 {strides = array<i32>} : memref<24x128xf32, #tpu.memory_space<vmem>>, vector<8x128xf32>,
    } else {
    }
    return
  }
  func.func @transform_0(%arg0: i32, %arg1: i32) -> (i32, i32) {
    %c2_i32 = arith.constant 2 : i32
    %0 = arith.muli %arg0, %c2_i32 : i32
    %1 = arith.addi %0, %arg1 : i32
    %c1_i32 = arith.constant 1 : i32
    %2 = arith.minsi %1, %c1_i32 : i32
    %c0_i32 = arith.constant 0 : i32
    %c0_i32_0 = arith.constant 0 : i32
    return %2, %c0_i32 : i32, i32
  }
  func.func @transform_1(%arg0: i32, %arg1: i32) -> (i32, i32) {
    %c2_i32 = arith.constant 2 : i32
    %0 = arith.muli %arg0, %c2_i32 : i32
    %1 = arith.addi %0, %arg1 : i32
    %c1_i32 = arith.constant 1 : i32
    %2 = arith.minsi %1, %c1_i32 : i32
    %c0_i32 = arith.constant 0 : i32
    %c0_i32_0 = arith.constant 0 : i32
    return %2, %c0_i32 : i32, i32
  }
  func.func @transform_2(%arg0: i32, %arg1: i32) -> (i32, i32) {
    %c0_i32 = arith.constant 0 : i32
    %c0_i32_0 = arith.constant 0 : i32
    return %arg0, %c0_i32 : i32, i32
  }
}

module attributes {stable_mosaic.version = 11 : i64} {
  func.func @kernel(%arg0: i32, %arg1: i32, %arg2: memref<1x1xf32, #tpu.memory_space<smem>>, %arg3: memref<8x128xf32, #tpu.memory_space<vmem>>, %arg4: memref<8x128xf32, #tpu.memory_space<vmem>>, %arg5: memref<16x128xf32, #tpu.memory_space<vmem>>, %arg6: memref<8x128xf32, #tpu.memory_space<vmem>>, %arg7: memref<8x128xf32, #tpu.memory_space<vmem>>) attributes {dimension_semantics = [#tpu.dimension_semantics<parallel>, #tpu.dimension_semantics<arbitrary>], iteration_bounds = array<i64: 1, 2>, scalar_prefetch = 0 : i64, scratch_operands = 2 : i64, tpu.core_type = #tpu.core_type<tc>, window_params = [{transform_indices = @transform_0, window_bounds = array<i64: 1, 1>}, {transform_indices = @transform_1, window_bounds = array<i64: 8, 128>}, {transform_indices = @transform_2, window_bounds = array<i64: 8, 128>}, {transform_indices = @transform_3, window_bounds = array<i64: 16, 128>}]} {
    %c0_i32 = arith.constant 0 : i32
    %0 = arith.cmpi eq, %arg1, %c0_i32 : i32
    %1 = arith.extui %0 : i1 to i32
    %c0_i32_0 = arith.constant 0 : i32
    %2 = arith.cmpi ne, %1, %c0_i32_0 : i32
    scf.if %2 {
      %cst_19 = arith.constant 0.000000e+00 : f32
      %33 = vector.broadcast %cst_19 : f32 to vector<8x128xf32>
      %c0_20 = arith.constant 0 : index
      %c0_21 = arith.constant 0 : index
      %34 = vector.load %arg6[%c0_20, %c0_21] : memref<8x128xf32, #tpu.memory_space<vmem>>, vector<8x128xf32>
      tpu.vector_store %arg6[%c0_20, %c0_21], %33 {strides = array<i32>} : memref<8x128xf32, #tpu.memory_space<vmem>>, vector<8x128xf32>,
      %cst_22 = arith.constant 0.000000e+00 : f32
      %35 = vector.broadcast %cst_22 : f32 to vector<8x128xf32>
      %c0_23 = arith.constant 0 : index
      %c0_24 = arith.constant 0 : index
      %36 = vector.load %arg7[%c0_23, %c0_24] : memref<8x128xf32, #tpu.memory_space<vmem>>, vector<8x128xf32>
      tpu.vector_store %arg7[%c0_23, %c0_24], %35 {strides = array<i32>} : memref<8x128xf32, #tpu.memory_space<vmem>>, vector<8x128xf32>,
    } else {
    }
    %c0 = arith.constant 0 : index
    %c0_1 = arith.constant 0 : index
    %3 = memref.load %arg2[%c0, %c0_1] : memref<1x1xf32, #tpu.memory_space<smem>>
    %c0_2 = arith.constant 0 : index
    %c0_3 = arith.constant 0 : index
    %4 = vector.load %arg3[%c0_2, %c0_3] : memref<8x128xf32, #tpu.memory_space<vmem>>, vector<8x128xf32>
    %c0_4 = arith.constant 0 : index
    %c0_5 = arith.constant 0 : index
    %5 = vector.load %arg4[%c0_4, %c0_5] : memref<8x128xf32, #tpu.memory_space<vmem>>, vector<8x128xf32>
    %cst = arith.constant 0.000000e+00 : f32
    %6 = vector.broadcast %cst : f32 to vector<8x128xf32>
    %7 = arith.cmpf ogt, %5, %6 : vector<8x128xf32>
    %8 = arith.subf %5, %4 : vector<8x128xf32>
    %9 = math.absf %8 : vector<8x128xf32>
    %cst_6 = arith.constant 0.000000e+00 : f32
    %10 = vector.broadcast %cst_6 : f32 to vector<8x128xf32>
    %11 = arith.select %7, %9, %10 : vector<8x128xi1>, vector<8x128xf32>
    %12 = vector.broadcast %3 : f32 to vector<8x128xf32>
    %13 = arith.cmpf ogt, %11, %12 : vector<8x128xf32>
    %14 = arith.andi %7, %13 : vector<8x128xi1>
    %15 = arith.mulf %11, %11 : vector<8x128xf32>
    %cst_7 = arith.constant 0.000000e+00 : f32
    %16 = vector.broadcast %cst_7 : f32 to vector<8x128xf32>
    %17 = arith.select %14, %15, %16 : vector<8x128xi1>, vector<8x128xf32>
    %c0_8 = arith.constant 0 : index
    %c0_9 = arith.constant 0 : index
    %18 = vector.load %arg6[%c0_8, %c0_9] : memref<8x128xf32, #tpu.memory_space<vmem>>, vector<8x128xf32>
    %19 = vector.shape_cast %17 : vector<8x128xf32> to vector<1x8x128xf32>
    %cst_10 = arith.constant dense<0.000000e+00> : vector<8x128xf32>
    %20 = vector.multi_reduction <add>, %19, %cst_10 [0] : vector<1x8x128xf32> to vector<8x128xf32>
    %21 = arith.addf %18, %20 : vector<8x128xf32>
    %c0_11 = arith.constant 0 : index
    %c0_12 = arith.constant 0 : index
    %22 = vector.load %arg6[%c0_11, %c0_12] : memref<8x128xf32, #tpu.memory_space<vmem>>, vector<8x128xf32>
    tpu.vector_store %arg6[%c0_11, %c0_12], %21 {strides = array<i32>} : memref<8x128xf32, #tpu.memory_space<vmem>>, vector<8x128xf32>,
    %c0_13 = arith.constant 0 : index
    %c0_14 = arith.constant 0 : index
    %23 = vector.load %arg7[%c0_13, %c0_14] : memref<8x128xf32, #tpu.memory_space<vmem>>, vector<8x128xf32>
    %24 = arith.extui %14 : vector<8x128xi1> to vector<8x128xi32>
    %25 = arith.sitofp %24 : vector<8x128xi32> to vector<8x128xf32>
    %26 = vector.shape_cast %25 : vector<8x128xf32> to vector<1x8x128xf32>
    %cst_15 = arith.constant dense<0.000000e+00> : vector<8x128xf32>
    %27 = vector.multi_reduction <add>, %26, %cst_15 [0] : vector<1x8x128xf32> to vector<8x128xf32>
    %28 = arith.addf %23, %27 : vector<8x128xf32>
    %c0_16 = arith.constant 0 : index
    %c0_17 = arith.constant 0 : index
    %29 = vector.load %arg7[%c0_16, %c0_17] : memref<8x128xf32, #tpu.memory_space<vmem>>, vector<8x128xf32>
    tpu.vector_store %arg7[%c0_16, %c0_17], %28 {strides = array<i32>} : memref<8x128xf32, #tpu.memory_space<vmem>>, vector<8x128xf32>,
    %c1_i32 = arith.constant 1 : i32
    %30 = arith.cmpi eq, %arg1, %c1_i32 : i32
    %31 = arith.extui %30 : i1 to i32
    %c0_i32_18 = arith.constant 0 : i32
    %32 = arith.cmpi ne, %31, %c0_i32_18 : i32
    scf.if %32 {
      %c0_19 = arith.constant 0 : index
      %c0_20 = arith.constant 0 : index
      %33 = vector.load %arg6[%c0_19, %c0_20] : memref<8x128xf32, #tpu.memory_space<vmem>>, vector<8x128xf32>
      %c0_21 = arith.constant 0 : index
      %c0_22 = arith.constant 0 : index
      %34 = vector.load %arg5[%c0_21, %c0_22] : memref<16x128xf32, #tpu.memory_space<vmem>>, vector<8x128xf32>
      tpu.vector_store %arg5[%c0_21, %c0_22], %33 {strides = array<i32>} : memref<16x128xf32, #tpu.memory_space<vmem>>, vector<8x128xf32>,
      %c0_23 = arith.constant 0 : index
      %c0_24 = arith.constant 0 : index
      %35 = vector.load %arg7[%c0_23, %c0_24] : memref<8x128xf32, #tpu.memory_space<vmem>>, vector<8x128xf32>
      %c8 = arith.constant 8 : index
      %c0_25 = arith.constant 0 : index
      %36 = vector.load %arg5[%c8, %c0_25] : memref<16x128xf32, #tpu.memory_space<vmem>>, vector<8x128xf32>
      tpu.vector_store %arg5[%c8, %c0_25], %35 {strides = array<i32>} : memref<16x128xf32, #tpu.memory_space<vmem>>, vector<8x128xf32>,
    } else {
    }
    return
  }
  func.func @transform_0(%arg0: i32, %arg1: i32) -> (i32, i32) {
    %c0_i32 = arith.constant 0 : i32
    %c0_i32_0 = arith.constant 0 : i32
    %c0_i32_1 = arith.constant 0 : i32
    return %c0_i32, %c0_i32_0 : i32, i32
  }
  func.func @transform_1(%arg0: i32, %arg1: i32) -> (i32, i32) {
    %c2_i32 = arith.constant 2 : i32
    %0 = arith.muli %arg0, %c2_i32 : i32
    %1 = arith.addi %0, %arg1 : i32
    %c1_i32 = arith.constant 1 : i32
    %2 = arith.minsi %1, %c1_i32 : i32
    %c0_i32 = arith.constant 0 : i32
    %c0_i32_0 = arith.constant 0 : i32
    return %2, %c0_i32 : i32, i32
  }
  func.func @transform_2(%arg0: i32, %arg1: i32) -> (i32, i32) {
    %c2_i32 = arith.constant 2 : i32
    %0 = arith.muli %arg0, %c2_i32 : i32
    %1 = arith.addi %0, %arg1 : i32
    %c1_i32 = arith.constant 1 : i32
    %2 = arith.minsi %1, %c1_i32 : i32
    %c0_i32 = arith.constant 0 : i32
    %c0_i32_0 = arith.constant 0 : i32
    return %2, %c0_i32 : i32, i32
  }
  func.func @transform_3(%arg0: i32, %arg1: i32) -> (i32, i32) {
    %c0_i32 = arith.constant 0 : i32
    %c0_i32_0 = arith.constant 0 : i32
    return %arg0, %c0_i32 : i32, i32
  }
}

</mosaic_0001>

<llo_original>
// kernel: berhu_loss.2
$region0: #{berhu_loss.2}
  #allocation0 [shape = 'u32[]', space=smem, size = 0x4, offset = 0x4, fixed_abs, tag = 'smem constant byte address 0x4 - core index']
  #allocation1 [shape = 'u32[72,128]{1,0:T(1,128)}', space=vmem, size = 0x9000, scoped, tag = 'internal scratch']
  #allocation2 [shape = 'f32[8,128]{1,0:T(8,128)}', space=vmem, size = 0x1000, scoped, tag = 'scratch operand']
  #allocation3 [shape = 'f32[8,128]{1,0:T(8,128)}', space=vmem, size = 0x1000, scoped, tag = 'scratch operand']
  #allocation4 [shape = 'f32[8,128]{1,0:T(8,128)}', space=vmem, size = 0x1000, scoped, tag = 'scratch operand']
  %s0 = inlined_call_operand.vmem [shape: f32[16,128], index: 0, kind: input, shape index: {}]
  %s1 = inlined_call_operand.vmem [shape: f32[16,128], index: 1, kind: input, shape index: {}]
  %s2 = inlined_call_operand.vmem [shape: f32[24,128], index: 2, kind: output, shape index: {}]
  %s3 = sld [smem:[#allocation0]]
  $region49: #{berhu_loss.2} parent=0
    _
  %s5 = ssub.s32 1, %s3
  %s6 = scalar_select 0, %s5, %s3
  loop: start=0, step=1, limit=4
  $region2: #{berhu_loss.2} parent=0 // loop_pre_header
    _
  $region3: #{berhu_loss.2} parent=0 // loop_header
    %s8 = sphi 0, %s12
    %p9 = scmp.ge.s32.totalorder %s8, 4
    %s15 = sphi 0, %s27
    %s16 = sphi 0, %s23
    %s17 = sphi 0, %s15
    %s18 = sphi 0, %s16
    %s19 = sphi 0, %s17
    %s20 = sphi 0, %s18
    %s38 = sphi 0, %s40
    %s41 = sphi 0, %s38
    %s42 = sphi 0, %s41
    %s58 = sphi 0, %s42
    %s72 = sphi 0, %s74
    %s75 = sphi 0, %s72
    %s76 = sphi 0, %s75
    %s92 = sphi 0, %s76
    %s98 = sphi 0, %s100
    %s101 = sphi 0, %s98
    %s102 = sphi 0, %s101
    %s118 = sphi 0, %s102
  $region4: #{berhu_loss.2} parent=0 // loop_header_branch
    %11 = sbr.rel (%p9) target = $region8
  $region5: #{berhu_loss.2} parent=0 // loop_body
    %s13 = ssub.s32 %s8, 1
    %s14 = ssub.s32 %s8, 2
    %s21 = sadd.s32 1, %s16
    %p22 = scmp.ge.s32.totalorder %s21, 2
    %s23 = scalar_select %p22, 0, %s21
    %s24 = sadd.s32 1, %s15
    %s25 = scalar_select %p22, %s24, %s15
    %p26 = scmp.ge.s32.totalorder %s25, 1
    %s27 = scalar_select %p26, 0, %s25
    %s28 = smul.u32 %s15, 2
    %s29 = sadd.s32 %s28, %s16
    %p30 = scmp.lt.s32.totalorder %s29, 1
    %s31 = scalar_select %p30, %s29, 1
    %s32 = smul.u32 %s27, 2
    %s33 = sadd.s32 %s32, %s23
    %p34 = scmp.lt.s32.totalorder %s33, 1
    %s35 = scalar_select %p34, %s33, 1
    %s36 = ssub.s32 %s31, %s35
    %p37 = scmp.eq.s32.totalorder %s36, 0
    %s39 = sadd.s32 %s38, 1
    %s40 = scalar_select %p37, %s38, %s39
    %p43 = pneg %p37
    %p44 = scmp.eq.s32.totalorder %s8, 1
    %p45 = por %p43, %p44
    %p46 = scmp.ne.s32.totalorder %s38, %s41
    %p47 = scmp.eq.s32.totalorder %s8, 0
    %p48 = por %p46, %p47
    %p49 = scmp.ne.s32.totalorder %s38, %s41
    %p50 = scmp.eq.s32.totalorder %s13, 1
    %p51 = por %p49, %p50
    %p52 = scmp.ne.s32.totalorder %s41, %s42
    %p53 = scmp.eq.s32.totalorder %s13, 0
    %p54 = por %p52, %p53
    %p55 = scmp.ne.s32.totalorder %s41, %s42
    %p56 = scmp.eq.s32.totalorder %s14, 1
    %p57 = por %p55, %p56
    %p59 = scmp.ne.s32.totalorder %s42, %s58
    %p60 = scmp.eq.s32.totalorder %s14, 0
    %p61 = por %p59, %p60
    %s62 = smul.u32 %s15, 2
    %s63 = sadd.s32 %s62, %s16
    %p64 = scmp.lt.s32.totalorder %s63, 1
    %s65 = scalar_select %p64, %s63, 1
    %s66 = smul.u32 %s27, 2
    %s67 = sadd.s32 %s66, %s23
    %p68 = scmp.lt.s32.totalorder %s67, 1
    %s69 = scalar_select %p68, %s67, 1
    %s70 = ssub.s32 %s65, %s69
    %p71 = scmp.eq.s32.totalorder %s70, 0
    %s73 = sadd.s32 %s72, 1
    %s74 = scalar_select %p71, %s72, %s73
    %p77 = pneg %p71
    %p78 = scmp.eq.s32.totalorder %s8, 1
    %p79 = por %p77, %p78
    %p80 = scmp.ne.s32.totalorder %s72, %s75
    %p81 = scmp.eq.s32.totalorder %s8, 0
    %p82 = por %p80, %p81
    %p83 = scmp.ne.s32.totalorder %s72, %s75
    %p84 = scmp.eq.s32.totalorder %s13, 1
    %p85 = por %p83, %p84
    %p86 = scmp.ne.s32.totalorder %s75, %s76
    %p87 = scmp.eq.s32.totalorder %s13, 0
    %p88 = por %p86, %p87
    %p89 = scmp.ne.s32.totalorder %s75, %s76
    %p90 = scmp.eq.s32.totalorder %s14, 1
    %p91 = por %p89, %p90
    %p93 = scmp.ne.s32.totalorder %s76, %s92
    %p94 = scmp.eq.s32.totalorder %s14, 0
    %p95 = por %p93, %p94
    %s96 = ssub.s32 %s15, %s27
    %p97 = scmp.eq.s32.totalorder %s96, 0
    %s99 = sadd.s32 %s98, 1
    %s100 = scalar_select %p97, %s98, %s99
    %p103 = pneg %p97
    %p104 = scmp.eq.s32.totalorder %s8, 1
    %p105 = por %p103, %p104
    %p106 = scmp.ne.s32.totalorder %s98, %s101
    %p107 = scmp.eq.s32.totalorder %s8, 0
    %p108 = por %p106, %p107
    %p109 = scmp.ne.s32.totalorder %s98, %s101
    %p110 = scmp.eq.s32.totalorder %s13, 1
    %p111 = por %p109, %p110
    %p112 = scmp.ne.s32.totalorder %s101, %s102
    %p113 = scmp.eq.s32.totalorder %s13, 0
    %p114 = por %p112, %p113
    %p115 = scmp.ne.s32.totalorder %s101, %s102
    %p116 = scmp.eq.s32.totalorder %s14, 1
    %p117 = por %p115, %p116
    %p119 = scmp.ne.s32.totalorder %s102, %s118
    %p120 = scmp.eq.s32.totalorder %s14, 0
    %p121 = por %p119, %p120
    %p122 = scmp.le.s32.totalorder 1, %s8
    %p123 = scmp.lt.s32.totalorder %s8, 3
    %p124 = pnand %p122, %p123
    %p125 = pneg %p124
    // Predicated region
    $region9: #{berhu_loss.2} parent=5 // pred_check
      _
    $region10: #{berhu_loss.2} parent=5 // pred_check_branch
      %127 = sbr.rel (%p124) target = $region12
    $region11: #{berhu_loss.2} parent=5 // pred_region
      %s128 = ssub.s32 %s8, 1
    $region12: #{berhu_loss.2} parent=5 // pred_fallthru
      _
    %p129 = scmp.lt.s32.totalorder %s8, 2
    // Predicated region
    $region13: #{berhu_loss.2} parent=5 // pred_check
      %p130 = pneg %p129
    $region14: #{berhu_loss.2} parent=5 // pred_check_branch
      %132 = sbr.rel (%p130) target = $region16
    $region15: #{berhu_loss.2} parent=5 // pred_region
      // Predicated region
      $region17: #{berhu_loss.2} parent=15 // pred_check
        %p133 = pneg %p48
      $region18: #{berhu_loss.2} parent=15 // pred_check_branch
        %135 = sbr.rel (%p133) target = $region20
      $region19: #{berhu_loss.2} parent=15 // pred_region
        %s136 = smul.u32 %s15, 2
        %s137 = sadd.s32 %s136, %s16
        %p138 = scmp.lt.s32.totalorder %s137, 1
        %s139 = scalar_select %p138, %s137, 1
        %p140 = scmp.lt.s32.totalorder %s139, 1
        %s141 = scalar_select %p140, %s139, 1
        %s142 = smul.addr %s141, 8
        %s143 = scalar_lea.vmem %s0, %s142
        %s144 = smul.u32 %s15, 2
        %s145 = sadd.s32 %s144, %s16
        %p146 = scmp.lt.s32.totalorder %s145, 1
        %s147 = scalar_select %p146, %s145, 1
      $region20: #{berhu_loss.2} parent=15 // pred_fallthru
        _
      // Predicated region
      $region21: #{berhu_loss.2} parent=15 // pred_check
        %p148 = pneg %p82
      $region22: #{berhu_loss.2} parent=15 // pred_check_branch
        %150 = sbr.rel (%p148) target = $region24
      $region23: #{berhu_loss.2} parent=15 // pred_region
        %s151 = smul.u32 %s15, 2
        %s152 = sadd.s32 %s151, %s16
        %p153 = scmp.lt.s32.totalorder %s152, 1
        %s154 = scalar_select %p153, %s152, 1
        %p155 = scmp.lt.s32.totalorder %s154, 1
        %s156 = scalar_select %p155, %s154, 1
        %s157 = smul.addr %s156, 8
        %s158 = scalar_lea.vmem %s1, %s157
        %s159 = smul.u32 %s15, 2
        %s160 = sadd.s32 %s159, %s16
        %p161 = scmp.lt.s32.totalorder %s160, 1
        %s162 = scalar_select %p161, %s160, 1
      $region24: #{berhu_loss.2} parent=15 // pred_fallthru
        _
    $region16: #{berhu_loss.2} parent=5 // pred_fallthru
      _
    %p163 = scmp.le.s32.totalorder 1, %s8
    %p164 = scmp.lt.s32.totalorder %s8, 3
    %p165 = pnand %p163, %p164
    %p166 = pneg %p165
    // Predicated region
    $region25: #{berhu_loss.2} parent=5 // pred_check
      _
    $region26: #{berhu_loss.2} parent=5 // pred_check_branch
      %168 = sbr.rel (%p165) target = $region28
    $region27: #{berhu_loss.2} parent=5 // pred_region
      %s169 = ssub.s32 %s8, 1
      %s170 = smul.u32 %s17, 2
      %s171 = sadd.s32 %s170, %s18
      %p172 = scmp.lt.s32.totalorder %s171, 1
      %s173 = scalar_select %p172, %s171, 1
      %p174 = scmp.lt.s32.totalorder %s173, 1
      %s175 = scalar_select %p174, %s173, 1
      %s176 = smul.addr %s175, 8
      %s177 = scalar_lea.vmem %s0, %s176
      %p178 = pneg %p54
      %p179 = pneg %p51
      %s180 = smul.u32 %s17, 2
      %s181 = sadd.s32 %s180, %s18
      %p182 = scmp.lt.s32.totalorder %s181, 1
      %s183 = scalar_select %p182, %s181, 1
      %p184 = scmp.lt.s32.totalorder %s183, 1
      %s185 = scalar_select %p184, %s183, 1
      %s186 = smul.addr %s185, 8
      %s187 = scalar_lea.vmem %s1, %s186
      %p188 = pneg %p88
      %p189 = pneg %p85
      %p190 = pneg %p114
      %p191 = pneg %p111
      %s192 = smul.u32 3, %s17
      %p193 = scmp.lt.s32.totalorder %s192, 2
      %s194 = scalar_select %p193, %s192, 2
      %s195 = smul.addr %s194, 8
      %s196 = scalar_lea.vmem %s2, %s195
      %s197 = smul.u32 %s17, 2
      %s198 = sadd.s32 %s197, %s18
      %p199 = scmp.lt.s32.totalorder %s198, 1
      %s200 = scalar_select %p199, %s198, 1
      %p201 = scmp.lt.s32.totalorder %s200, 1
      %s202 = scalar_select %p201, %s200, 1
      %s203 = smul.addr %s202, 8
      %s204 = scalar_lea.vmem %s0, %s203
      %s205 = smul.u32 %s17, 2
      %s206 = sadd.s32 %s205, %s18
      %p207 = scmp.lt.s32.totalorder %s206, 1
      %s208 = scalar_select %p207, %s206, 1
      %s209 = smul.u32 %s17, 2
      %s210 = sadd.s32 %s209, %s18
      %p211 = scmp.lt.s32.totalorder %s210, 1
      %s212 = scalar_select %p211, %s210, 1
      %p213 = scmp.lt.s32.totalorder %s212, 1
      %s214 = scalar_select %p213, %s212, 1
      %s215 = smul.addr %s214, 8
      %s216 = scalar_lea.vmem %s1, %s215
      %s217 = smul.u32 %s17, 2
      %s218 = sadd.s32 %s217, %s18
      %p219 = scmp.lt.s32.totalorder %s218, 1
      %s220 = scalar_select %p219, %s218, 1
      %s221 = smul.u32 3, %s17
      %p222 = scmp.lt.s32.totalorder %s221, 2
      %s223 = scalar_select %p222, %s221, 2
      %s224 = smul.addr %s223, 8
      %s225 = scalar_lea.vmem %s2, %s224
      %s226 = smul.u32 3, %s17
      %p227 = scmp.eq.s32.totalorder %s18, 0
      // Predicated region
      $region29: #{berhu_loss.2} parent=27 // pred_check
        %p228 = pneg %p227
      $region30: #{berhu_loss.2} parent=27 // pred_check_branch
        %230 = sbr.rel (%p228) target = $region32
      $region31: #{berhu_loss.2} parent=27 // pred_region
        %231 = vst [vmem:[#allocation2] sm:$0xff] -inf
        %232 = vst [vmem:[#allocation3] sm:$0xff] 0.0
        %233 = vst [vmem:[#allocation4] sm:$0xff] 0.0
      $region32: #{berhu_loss.2} parent=27 // pred_fallthru
        _
      %v234 = vld [vmem:[%s204] sm:$0xff]
      %v235 = vld [vmem:[%s216] sm:$0xff]
      %v236 = vsub.f32 %v234, %v235
      %vm237 = vcmp.gt.f32.partialorder %v235, 0.0
      %v238 = vand.u32 2147483647, %v236
      %v239 = vsel %vm237, %v238, 0.0
      %v240 = vld [vmem:[#allocation2] sm:$0xff]
      %v241 = vmax.f32 %v240, %v236
      %242 = vst [vmem:[#allocation2] sm:$0xff] %v241
      %v243 = vld [vmem:[#allocation3] sm:$0xff]
      %v244 = vadd.f32 %v239, 0.0
      %v245 = vadd.f32 %v243, %v244
      %246 = vst [vmem:[#allocation3] sm:$0xff] %v245
      %v247 = vld [vmem:[#allocation4] sm:$0xff]
      %v248 = vsel %vm237, 1, 0
      %v249 = vcvt.s32.f32 %v248
      %v250 = vadd.f32 %v249, 0.0
      %v251 = vadd.f32 %v247, %v250
      %252 = vst [vmem:[#allocation4] sm:$0xff] %v251
      %p253 = scmp.eq.s32.totalorder %s18, 1
      // Predicated region
      $region33: #{berhu_loss.2} parent=27 // pred_check
        %p254 = pneg %p253
      $region34: #{berhu_loss.2} parent=27 // pred_check_branch
        %256 = sbr.rel (%p254) target = $region36
      $region35: #{berhu_loss.2} parent=27 // pred_region
        %v257 = vld [vmem:[#allocation2] sm:$0xff]
        %258 = vst [vmem:[%s225] sm:$0xff] %v257
        %v259 = vld [vmem:[#allocation3] sm:$0xff]
        %260 = vst [vmem:[%s225 + $0x8] sm:$0xff] %v259
        %v261 = vld [vmem:[#allocation4] sm:$0xff]
        %262 = vst [vmem:[%s225 + $0x10] sm:$0xff] %v261
      $region36: #{berhu_loss.2} parent=27 // pred_fallthru
        _
      %s263 = smul.u32 3, %s17
      %p264 = scmp.lt.s32.totalorder %s263, 2
      %s265 = scalar_select %p264, %s263, 2
      %s266 = smul.addr %s265, 8
      %s267 = scalar_lea.vmem %s2, %s266
      // Predicated region
      $region37: #{berhu_loss.2} parent=27 // pred_check
        %p268 = pneg %p111
      $region38: #{berhu_loss.2} parent=27 // pred_check_branch
        %270 = sbr.rel (%p268) target = $region40
      $region39: #{berhu_loss.2} parent=27 // pred_region
        %s271 = smul.u32 3, %s17
      $region40: #{berhu_loss.2} parent=27 // pred_fallthru
        _
      // Predicated region
      $region41: #{berhu_loss.2} parent=27 // pred_check
        %p272 = pneg %p111
      $region42: #{berhu_loss.2} parent=27 // pred_check_branch
        %274 = sbr.rel (%p272) target = $region44
      $region43: #{berhu_loss.2} parent=27 // pred_region
        %s275 = smul.u32 3, %s17
        %p276 = scmp.lt.s32.totalorder %s275, 2
        %s277 = scalar_select %p276, %s275, 2
        %s278 = smul.addr %s277, 8
        %s279 = scalar_lea.vmem %s2, %s278
      $region44: #{berhu_loss.2} parent=27 // pred_fallthru
        _
    $region28: #{berhu_loss.2} parent=5 // pred_fallthru
      _
    %p280 = scmp.le.s32.totalorder 2, %s8
    // Predicated region
    $region45: #{berhu_loss.2} parent=5 // pred_check
      %p281 = pneg %p280
    $region46: #{berhu_loss.2} parent=5 // pred_check_branch
      %283 = sbr.rel (%p281) target = $region48
    $region47: #{berhu_loss.2} parent=5 // pred_region
      %s284 = ssub.s32 %s8, 2
    $region48: #{berhu_loss.2} parent=5 // pred_fallthru
      _
  $region6: #{berhu_loss.2} parent=0 // loop_footer
    %s12 = sadd.s32 1, %s8
  $region7: #{berhu_loss.2} parent=0 // loop_footer_branch
    %7 = sbr.rel target = $region3
  $region8: #{berhu_loss.2} parent=0 // loop_exit
    _

// kernel: berhu_loss.3
$region0: #{berhu_loss.3}
  #allocation0 [shape = 'u32[]', space=smem, size = 0x4, offset = 0x4, fixed_abs, tag = 'smem constant byte address 0x4 - core index']
  #allocation1 [shape = 'u32[72,128]{1,0:T(1,128)}', space=vmem, size = 0x9000, scoped, tag = 'internal scratch']
  #allocation2 [shape = 'f32[8,128]{1,0:T(8,128)}', space=vmem, size = 0x1000, scoped, tag = 'scratch operand']
  #allocation3 [shape = 'f32[8,128]{1,0:T(8,128)}', space=vmem, size = 0x1000, scoped, tag = 'scratch operand']
  #allocation4 [shape = 'f32[1,1]{1,0:T(1,128)S(6)}', space=smem, size = 0x200, scoped, tag = 'scoped memory for berhu_loss.3']
  %s0 = inlined_call_operand.<no memory space> [shape: f32[1,1], index: 0, kind: input, shape index: {}]
  %s1 = inlined_call_operand.vmem [shape: f32[16,128], index: 1, kind: input, shape index: {}]
  %s2 = inlined_call_operand.vmem [shape: f32[16,128], index: 2, kind: input, shape index: {}]
  %s3 = inlined_call_operand.vmem [shape: f32[16,128], index: 3, kind: output, shape index: {}]
  %s4 = sld [smem:[#allocation0]]
  $region53: #{berhu_loss.3} parent=0
    _
  %s6 = ssub.s32 1, %s4
  %s7 = scalar_select 0, %s6, %s4
  %8 = sst [smem:[#allocation4]] %s0
  loop: start=0, step=1, limit=4
  $region2: #{berhu_loss.3} parent=0 // loop_pre_header
    _
  $region3: #{berhu_loss.3} parent=0 // loop_header
    %s10 = sphi 0, %s14
    %p11 = scmp.ge.s32.totalorder %s10, 4
    %s17 = sphi 0, %s29
    %s18 = sphi 0, %s25
    %s19 = sphi 0, %s17
    %s20 = sphi 0, %s18
    %s21 = sphi 0, %s19
    %s22 = sphi 0, %s20
    %s30 = sphi 0, %s30
    %s32 = sphi 0, %s30
    %s33 = sphi 0, %s32
    %s47 = sphi 0, %s33
    %s61 = sphi 0, %s63
    %s64 = sphi 0, %s61
    %s65 = sphi 0, %s64
    %s81 = sphi 0, %s65
    %s95 = sphi 0, %s97
    %s98 = sphi 0, %s95
    %s99 = sphi 0, %s98
    %s115 = sphi 0, %s99
    %s121 = sphi 0, %s123
    %s124 = sphi 0, %s121
    %s125 = sphi 0, %s124
    %s141 = sphi 0, %s125
  $region4: #{berhu_loss.3} parent=0 // loop_header_branch
    %13 = sbr.rel (%p11) target = $region8
  $region5: #{berhu_loss.3} parent=0 // loop_body
    %s15 = ssub.s32 %s10, 1
    %s16 = ssub.s32 %s10, 2
    %s23 = sadd.s32 1, %s18
    %p24 = scmp.ge.s32.totalorder %s23, 2
    %s25 = scalar_select %p24, 0, %s23
    %s26 = sadd.s32 1, %s17
    %s27 = scalar_select %p24, %s26, %s17
    %p28 = scmp.ge.s32.totalorder %s27, 1
    %s29 = scalar_select %p28, 0, %s27
    %s31 = sadd.s32 %s30, 1
    %p34 = scmp.eq.s32.totalorder %s10, 1
    %p35 = scmp.ne.s32.totalorder %s30, %s32
    %p36 = scmp.eq.s32.totalorder %s10, 0
    %p37 = por %p35, %p36
    %p38 = scmp.ne.s32.totalorder %s30, %s32
    %p39 = scmp.eq.s32.totalorder %s15, 1
    %p40 = por %p38, %p39
    %p41 = scmp.ne.s32.totalorder %s32, %s33
    %p42 = scmp.eq.s32.totalorder %s15, 0
    %p43 = por %p41, %p42
    %p44 = scmp.ne.s32.totalorder %s32, %s33
    %p45 = scmp.eq.s32.totalorder %s16, 1
    %p46 = por %p44, %p45
    %p48 = scmp.ne.s32.totalorder %s33, %s47
    %p49 = scmp.eq.s32.totalorder %s16, 0
    %p50 = por %p48, %p49
    %s51 = smul.u32 %s17, 2
    %s52 = sadd.s32 %s51, %s18
    %p53 = scmp.lt.s32.totalorder %s52, 1
    %s54 = scalar_select %p53, %s52, 1
    %s55 = smul.u32 %s29, 2
    %s56 = sadd.s32 %s55, %s25
    %p57 = scmp.lt.s32.totalorder %s56, 1
    %s58 = scalar_select %p57, %s56, 1
    %s59 = ssub.s32 %s54, %s58
    %p60 = scmp.eq.s32.totalorder %s59, 0
    %s62 = sadd.s32 %s61, 1
    %s63 = scalar_select %p60, %s61, %s62
    %p66 = pneg %p60
    %p67 = scmp.eq.s32.totalorder %s10, 1
    %p68 = por %p66, %p67
    %p69 = scmp.ne.s32.totalorder %s61, %s64
    %p70 = scmp.eq.s32.totalorder %s10, 0
    %p71 = por %p69, %p70
    %p72 = scmp.ne.s32.totalorder %s61, %s64
    %p73 = scmp.eq.s32.totalorder %s15, 1
    %p74 = por %p72, %p73
    %p75 = scmp.ne.s32.totalorder %s64, %s65
    %p76 = scmp.eq.s32.totalorder %s15, 0
    %p77 = por %p75, %p76
    %p78 = scmp.ne.s32.totalorder %s64, %s65
    %p79 = scmp.eq.s32.totalorder %s16, 1
    %p80 = por %p78, %p79
    %p82 = scmp.ne.s32.totalorder %s65, %s81
    %p83 = scmp.eq.s32.totalorder %s16, 0
    %p84 = por %p82, %p83
    %s85 = smul.u32 %s17, 2
    %s86 = sadd.s32 %s85, %s18
    %p87 = scmp.lt.s32.totalorder %s86, 1
    %s88 = scalar_select %p87, %s86, 1
    %s89 = smul.u32 %s29, 2
    %s90 = sadd.s32 %s89, %s25
    %p91 = scmp.lt.s32.totalorder %s90, 1
    %s92 = scalar_select %p91, %s90, 1
    %s93 = ssub.s32 %s88, %s92
    %p94 = scmp.eq.s32.totalorder %s93, 0
    %s96 = sadd.s32 %s95, 1
    %s97 = scalar_select %p94, %s95, %s96
    %p100 = pneg %p94
    %p101 = scmp.eq.s32.totalorder %s10, 1
    %p102 = por %p100, %p101
    %p103 = scmp.ne.s32.totalorder %s95, %s98
    %p104 = scmp.eq.s32.totalorder %s10, 0
    %p105 = por %p103, %p104
    %p106 = scmp.ne.s32.totalorder %s95, %s98
    %p107 = scmp.eq.s32.totalorder %s15, 1
    %p108 = por %p106, %p107
    %p109 = scmp.ne.s32.totalorder %s98, %s99
    %p110 = scmp.eq.s32.totalorder %s15, 0
    %p111 = por %p109, %p110
    %p112 = scmp.ne.s32.totalorder %s98, %s99
    %p113 = scmp.eq.s32.totalorder %s16, 1
    %p114 = por %p112, %p113
    %p116 = scmp.ne.s32.totalorder %s99, %s115
    %p117 = scmp.eq.s32.totalorder %s16, 0
    %p118 = por %p116, %p117
    %s119 = ssub.s32 %s17, %s29
    %p120 = scmp.eq.s32.totalorder %s119, 0
    %s122 = sadd.s32 %s121, 1
    %s123 = scalar_select %p120, %s121, %s122
    %p126 = pneg %p120
    %p127 = scmp.eq.s32.totalorder %s10, 1
    %p128 = por %p126, %p127
    %p129 = scmp.ne.s32.totalorder %s121, %s124
    %p130 = scmp.eq.s32.totalorder %s10, 0
    %p131 = por %p129, %p130
    %p132 = scmp.ne.s32.totalorder %s121, %s124
    %p133 = scmp.eq.s32.totalorder %s15, 1
    %p134 = por %p132, %p133
    %p135 = scmp.ne.s32.totalorder %s124, %s125
    %p136 = scmp.eq.s32.totalorder %s15, 0
    %p137 = por %p135, %p136
    %p138 = scmp.ne.s32.totalorder %s124, %s125
    %p139 = scmp.eq.s32.totalorder %s16, 1
    %p140 = por %p138, %p139
    %p142 = scmp.ne.s32.totalorder %s125, %s141
    %p143 = scmp.eq.s32.totalorder %s16, 0
    %p144 = por %p142, %p143
    %p145 = scmp.le.s32.totalorder 1, %s10
    %p146 = scmp.lt.s32.totalorder %s10, 3
    %p147 = pnand %p145, %p146
    %p148 = pneg %p147
    // Predicated region
    $region9: #{berhu_loss.3} parent=5 // pred_check
      _
    $region10: #{berhu_loss.3} parent=5 // pred_check_branch
      %150 = sbr.rel (%p147) target = $region12
    $region11: #{berhu_loss.3} parent=5 // pred_region
      %s151 = ssub.s32 %s10, 1
      // Predicated region
      $region13: #{berhu_loss.3} parent=11 // pred_check
        %p152 = pneg %p43
      $region14: #{berhu_loss.3} parent=11 // pred_check_branch
        %154 = sbr.rel (%p152) target = $region16
      $region15: #{berhu_loss.3} parent=11 // pred_region
        _
      $region16: #{berhu_loss.3} parent=11 // pred_fallthru
        _
    $region12: #{berhu_loss.3} parent=5 // pred_fallthru
      _
    %p155 = scmp.lt.s32.totalorder %s10, 2
    // Predicated region
    $region17: #{berhu_loss.3} parent=5 // pred_check
      %p156 = pneg %p155
    $region18: #{berhu_loss.3} parent=5 // pred_check_branch
      %158 = sbr.rel (%p156) target = $region20
    $region19: #{berhu_loss.3} parent=5 // pred_region
      // Predicated region
      $region21: #{berhu_loss.3} parent=19 // pred_check
        %p159 = pneg %p71
      $region22: #{berhu_loss.3} parent=19 // pred_check_branch
        %161 = sbr.rel (%p159) target = $region24
      $region23: #{berhu_loss.3} parent=19 // pred_region
        %s162 = smul.u32 %s17, 2
        %s163 = sadd.s32 %s162, %s18
        %p164 = scmp.lt.s32.totalorder %s163, 1
        %s165 = scalar_select %p164, %s163, 1
        %p166 = scmp.lt.s32.totalorder %s165, 1
        %s167 = scalar_select %p166, %s165, 1
        %s168 = smul.addr %s167, 8
        %s169 = scalar_lea.vmem %s1, %s168
        %s170 = smul.u32 %s17, 2
        %s171 = sadd.s32 %s170, %s18
        %p172 = scmp.lt.s32.totalorder %s171, 1
        %s173 = scalar_select %p172, %s171, 1
      $region24: #{berhu_loss.3} parent=19 // pred_fallthru
        _
      // Predicated region
      $region25: #{berhu_loss.3} parent=19 // pred_check
        %p174 = pneg %p105
      $region26: #{berhu_loss.3} parent=19 // pred_check_branch
        %176 = sbr.rel (%p174) target = $region28
      $region27: #{berhu_loss.3} parent=19 // pred_region
        %s177 = smul.u32 %s17, 2
        %s178 = sadd.s32 %s177, %s18
        %p179 = scmp.lt.s32.totalorder %s178, 1
        %s180 = scalar_select %p179, %s178, 1
        %p181 = scmp.lt.s32.totalorder %s180, 1
        %s182 = scalar_select %p181, %s180, 1
        %s183 = smul.addr %s182, 8
        %s184 = scalar_lea.vmem %s2, %s183
        %s185 = smul.u32 %s17, 2
        %s186 = sadd.s32 %s185, %s18
        %p187 = scmp.lt.s32.totalorder %s186, 1
        %s188 = scalar_select %p187, %s186, 1
      $region28: #{berhu_loss.3} parent=19 // pred_fallthru
        _
    $region20: #{berhu_loss.3} parent=5 // pred_fallthru
      _
    %p189 = scmp.le.s32.totalorder 1, %s10
    %p190 = scmp.lt.s32.totalorder %s10, 3
    %p191 = pnand %p189, %p190
    %p192 = pneg %p191
    // Predicated region
    $region29: #{berhu_loss.3} parent=5 // pred_check
      _
    $region30: #{berhu_loss.3} parent=5 // pred_check_branch
      %194 = sbr.rel (%p191) target = $region32
    $region31: #{berhu_loss.3} parent=5 // pred_region
      %s195 = ssub.s32 %s10, 1
      %p196 = pneg %p43
      %p197 = pneg %p40
      %s198 = smul.u32 %s19, 2
      %s199 = sadd.s32 %s198, %s20
      %p200 = scmp.lt.s32.totalorder %s199, 1
      %s201 = scalar_select %p200, %s199, 1
      %p202 = scmp.lt.s32.totalorder %s201, 1
      %s203 = scalar_select %p202, %s201, 1
      %s204 = smul.addr %s203, 8
      %s205 = scalar_lea.vmem %s1, %s204
      %p206 = pneg %p77
      %p207 = pneg %p74
      %s208 = smul.u32 %s19, 2
      %s209 = sadd.s32 %s208, %s20
      %p210 = scmp.lt.s32.totalorder %s209, 1
      %s211 = scalar_select %p210, %s209, 1
      %p212 = scmp.lt.s32.totalorder %s211, 1
      %s213 = scalar_select %p212, %s211, 1
      %s214 = smul.addr %s213, 8
      %s215 = scalar_lea.vmem %s2, %s214
      %p216 = pneg %p111
      %p217 = pneg %p108
      %p218 = pneg %p137
      %p219 = pneg %p134
      %s220 = smul.u32 2, %s19
      %p221 = scmp.lt.s32.totalorder %s220, 1
      %s222 = scalar_select %p221, %s220, 1
      %s223 = smul.addr %s222, 8
      %s224 = scalar_lea.vmem %s3, %s223
      %s225 = smul.u32 %s19, 2
      %s226 = sadd.s32 %s225, %s20
      %p227 = scmp.lt.s32.totalorder %s226, 1
      %s228 = scalar_select %p227, %s226, 1
      %p229 = scmp.lt.s32.totalorder %s228, 1
      %s230 = scalar_select %p229, %s228, 1
      %s231 = smul.addr %s230, 8
      %s232 = scalar_lea.vmem %s1, %s231
      %s233 = smul.u32 %s19, 2
      %s234 = sadd.s32 %s233, %s20
      %p235 = scmp.lt.s32.totalorder %s234, 1
      %s236 = scalar_select %p235, %s234, 1
      %s237 = smul.u32 %s19, 2
      %s238 = sadd.s32 %s237, %s20
      %p239 = scmp.lt.s32.totalorder %s238, 1
      %s240 = scalar_select %p239, %s238, 1
      %p241 = scmp.lt.s32.totalorder %s240, 1
      %s242 = scalar_select %p241, %s240, 1
      %s243 = smul.addr %s242, 8
      %s244 = scalar_lea.vmem %s2, %s243
      %s245 = smul.u32 %s19, 2
      %s246 = sadd.s32 %s245, %s20
      %p247 = scmp.lt.s32.totalorder %s246, 1
      %s248 = scalar_select %p247, %s246, 1
      %s249 = smul.u32 2, %s19
      %p250 = scmp.lt.s32.totalorder %s249, 1
      %s251 = scalar_select %p250, %s249, 1
      %s252 = smul.addr %s251, 8
      %s253 = scalar_lea.vmem %s3, %s252
      %s254 = smul.u32 2, %s19
      %p255 = scmp.eq.s32.totalorder %s20, 0
      // Predicated region
      $region33: #{berhu_loss.3} parent=31 // pred_check
        %p256 = pneg %p255
      $region34: #{berhu_loss.3} parent=31 // pred_check_branch
        %258 = sbr.rel (%p256) target = $region36
      $region35: #{berhu_loss.3} parent=31 // pred_region
        %259 = vst [vmem:[#allocation2] sm:$0xff] 0.0
        %260 = vst [vmem:[#allocation3] sm:$0xff] 0.0
      $region36: #{berhu_loss.3} parent=31 // pred_fallthru
        _
      %s261 = sld [smem:[#allocation4]]
      %v262 = vld [vmem:[%s232] sm:$0xff]
      %v263 = vld [vmem:[%s244] sm:$0xff]
      %vm264 = vcmp.gt.f32.partialorder %v263, 0.0
      %v265 = vsub.f32 %v263, %v262
      %v266 = vand.u32 2147483647, %v265
      %v267 = vsel %vm264, %v266, 0.0
      %v268 = vstv %s261
      %vm269 = vcmp.gt.f32.partialorder %v267, %v268
      %vm270 = vmand %vm264, %vm269
      %v271 = vmul.f32 %v267, %v267
      %v272 = vsel %vm270, %v271, 0.0
      %v273 = vld [vmem:[#allocation2] sm:$0xff]
      %v274 = vadd.f32 %v272, 0.0
      %v275 = vadd.f32 %v273, %v274
      %276 = vst [vmem:[#allocation2] sm:$0xff] %v275
      %v277 = vld [vmem:[#allocation3] sm:$0xff]
      %v278 = vsel %vm270, 1, 0
      %v279 = vcvt.s32.f32 %v278
      %v280 = vadd.f32 %v279, 0.0
      %v281 = vadd.f32 %v277, %v280
      %282 = vst [vmem:[#allocation3] sm:$0xff] %v281
      %p283 = scmp.eq.s32.totalorder %s20, 1
      // Predicated region
      $region37: #{berhu_loss.3} parent=31 // pred_check
        %p284 = pneg %p283
      $region38: #{berhu_loss.3} parent=31 // pred_check_branch
        %286 = sbr.rel (%p284) target = $region40
      $region39: #{berhu_loss.3} parent=31 // pred_region
        %v287 = vld [vmem:[#allocation2] sm:$0xff]
        %288 = vst [vmem:[%s253] sm:$0xff] %v287
        %v289 = vld [vmem:[#allocation3] sm:$0xff]
        %290 = vst [vmem:[%s253 + $0x8] sm:$0xff] %v289
      $region40: #{berhu_loss.3} parent=31 // pred_fallthru
        _
      %s291 = smul.u32 2, %s19
      %p292 = scmp.lt.s32.totalorder %s291, 1
      %s293 = scalar_select %p292, %s291, 1
      %s294 = smul.addr %s293, 8
      %s295 = scalar_lea.vmem %s3, %s294
      // Predicated region
      $region41: #{berhu_loss.3} parent=31 // pred_check
        %p296 = pneg %p134
      $region42: #{berhu_loss.3} parent=31 // pred_check_branch
        %298 = sbr.rel (%p296) target = $region44
      $region43: #{berhu_loss.3} parent=31 // pred_region
        %s299 = smul.u32 2, %s19
      $region44: #{berhu_loss.3} parent=31 // pred_fallthru
        _
      // Predicated region
      $region45: #{berhu_loss.3} parent=31 // pred_check
        %p300 = pneg %p134
      $region46: #{berhu_loss.3} parent=31 // pred_check_branch
        %302 = sbr.rel (%p300) target = $region48
      $region47: #{berhu_loss.3} parent=31 // pred_region
        %s303 = smul.u32 2, %s19
        %p304 = scmp.lt.s32.totalorder %s303, 1
        %s305 = scalar_select %p304, %s303, 1
        %s306 = smul.addr %s305, 8
        %s307 = scalar_lea.vmem %s3, %s306
      $region48: #{berhu_loss.3} parent=31 // pred_fallthru
        _
    $region32: #{berhu_loss.3} parent=5 // pred_fallthru
      _
    %p308 = scmp.le.s32.totalorder 2, %s10
    // Predicated region
    $region49: #{berhu_loss.3} parent=5 // pred_check
      %p309 = pneg %p308
    $region50: #{berhu_loss.3} parent=5 // pred_check_branch
      %311 = sbr.rel (%p309) target = $region52
    $region51: #{berhu_loss.3} parent=5 // pred_region
      %s312 = ssub.s32 %s10, 2
    $region52: #{berhu_loss.3} parent=5 // pred_fallthru
      _
  $region6: #{berhu_loss.3} parent=0 // loop_footer
    %s14 = sadd.s32 1, %s10
  $region7: #{berhu_loss.3} parent=0 // loop_footer_branch
    %9 = sbr.rel target = $region3
  $region8: #{berhu_loss.3} parent=0 // loop_exit
    _

</llo_original>
